<compile_context>
chip_gen: v7x
topology: tpu7x:2x2x1
jax: 0.10.0
libtpu: 0.0.40
codegen_flags: <defaults>
</compile_context>

<pallas_src>
import jax
import jax.numpy as jnp
from jax.experimental import pallas as pl
from jax.experimental.pallas import tpu as pltpu

BN_EPS = 1e-5
BF16_ROW = 16          # bf16 packs 2 rows per sublane -> batch tiles in multiples of 16
MIN_LANE = 128         # vreg lane width


def _round_up(n: int, m: int) -> int:
    return ((n + m - 1) // m) * m


def _pad2(a, rows: int, cols: int):
    r, c = a.shape
    return jnp.pad(a, ((0, rows - r), (0, cols - c)))


# ----------------------------- device heuristics -----------------------------

def _device_kind() -> str:
    try:
        return jax.devices()[0].device_kind.lower()
    except Exception:
        return ""


def _num_tensorcores() -> int:
    # v7x exposes 2 TensorCores per chip; v5e/v6e have 1.  Default to 1 (safe).
    kind = _device_kind()
    return 2 if "7" in kind else 1


def _mxu_n_lane() -> int:
    # v6e/v7x MXUs are 2x256x256 -> pad large N dims to 256; v5e (4x128x128) -> 128.
    kind = _device_kind()
    return 128 if "v5" in kind else 256


def _vmem_capacity_bytes() -> int:
    try:
        return int(pltpu.get_tpu_info().vmem_capacity_bytes)
    except Exception:
        return 64 * 1024 * 1024  # v7x worst case


def _pad_n(n: int, mxu_n: int) -> int:
    # Small dims stay at 128 lanes; only widen to the MXU column width when the
    # real dim is already >= 128 (otherwise it is pure padding waste).
    if n >= 128 and mxu_n > 128:
        return _round_up(n, mxu_n)
    return _round_up(n, MIN_LANE)


# --------------------------------- kernel ------------------------------------

def _make_mlp_kernel(n_hidden_blocks: int):
    """Build a fused MLP kernel for a given number of hidden blocks."""

    def kernel(*refs):
        # refs: x, [w, b, bn_scale, bn_shift] * n_hidden, w_out, b_out, out
        x_ref = refs[0]
        idx = 1
        h = x_ref[...]                                   # bf16 activations
        for _ in range(n_hidden_blocks):
            w_ref, b_ref, s_ref, t_ref = refs[idx:idx + 4]
            idx += 4
            # Linear (bf16 x bf16 -> f32 MXU accumulation) -> ReLU
            z = jnp.dot(h, w_ref[...], preferred_element_type=jnp.float32) + b_ref[...]
            z = jnp.maximum(z, 0.0)
            # ReLU(Dropout(.)) is a no-op here (eval-mode dropout + z already >= 0).
            # ReLU(BatchNorm(.)) with BN pre-folded into scale/shift by the wrapper.
            z = jnp.maximum(z * s_ref[...] + t_ref[...], 0.0)
            h = z.astype(jnp.bfloat16)
        w_out_ref, b_out_ref, o_ref = refs[idx], refs[idx + 1], refs[idx + 2]
        o_ref[...] = (
            jnp.dot(h, w_out_ref[...], preferred_element_type=jnp.float32) + b_out_ref[...]
        ).astype(o_ref.dtype)

    return kernel


# --------------------------------- wrapper -----------------------------------

def _choose_batch_tile(B, tb, n_cores, per_row_bytes, budget_bytes):
    """Pick the batch-tile size: 1 step on single-TC chips, >=2 on dual-TC chips."""
    bp_min = _round_up(B, BF16_ROW)
    if tb is None:
        if n_cores <= 1:
            tb = bp_min                                        # single grid step
        else:
            tb = _round_up(pl.cdiv(B, n_cores), BF16_ROW)      # >= n_cores parallel steps
    else:
        tb = max(BF16_ROW, _round_up(min(tb, bp_min), BF16_ROW))
    # Shrink until the streamed per-step working set fits the VMEM budget.
    while tb > BF16_ROW and per_row_bytes * tb > budget_bytes:
        tb = max(BF16_ROW, _round_up(tb // 2, BF16_ROW))
    return tb


def mlp_forward(x, params, *, tb=None, out_dtype=jnp.float32):
    """Run the fused MLP Pallas kernel (eval-mode), padding + tiling the batch dim."""
    B, D = x.shape
    n_hidden = len(params["hidden"])
    C = params["w_out"].shape[1]

    mxu_n = _mxu_n_lane()
    n_cores = _num_tensorcores()
    vmem_cap = _vmem_capacity_bytes()
    vmem_limit = min(vmem_cap, 128 << 20) - (4 << 20)          # scoped-VMEM request

    # --- padded feature dims (zero padding is numerically exact for this model) ---
    Dp = _round_up(D, MIN_LANE)                                # K of the first matmul
    hidden_dims = [blk["w"].shape[1] for blk in params["hidden"]]
    Hps = [_pad_n(h, mxu_n) for h in hidden_dims]
    Cp = _pad_n(C, mxu_n)

    # --- parameter bytes (weights bf16; bias/scale/shift f32), fed as resident blocks ---
    param_bytes = 0
    in_dim_p = Dp
    for Hp in Hps:
        param_bytes += in_dim_p * Hp * 2 + 3 * Hp * 4
        in_dim_p = Hp
    param_bytes += in_dim_p * Cp * 2 + Cp * 4

    out_itemsize = jnp.dtype(out_dtype).itemsize
    max_feat = max([Dp, Cp] + Hps) if Hps else max(Dp, Cp)
    # Per-batch-row working set: double-buffered x block + output block + f32 temporaries.
    per_row = 2 * Dp * 2 + 2 * Cp * out_itemsize + 4 * max_feat * 4

    # Budget left for the streamed blocks (params counted x2 to cover buffering).
    budget = vmem_limit - (4 << 20) - 2 * param_bytes
    if budget <= per_row * BF16_ROW:
        # TODO(synk): add K/N tiling of each Linear (grid over n/k + VMEM f32 accumulator)
        # for layer sizes whose weights do not fit VMEM as resident blocks.
        raise NotImplementedError(
            "MLP parameters too large for the resident-weight kernel; needs K/N tiling.")

    tb = _choose_batch_tile(B, tb, n_cores, per_row, budget)
    grid = pl.cdiv(_round_up(B, BF16_ROW), tb)
    Bp = grid * tb

    x_p = _pad2(x, Bp, Dp).astype(jnp.bfloat16)

    def rep_spec(arr):
        # Whole (small) 2-D parameter block, same block index every grid step:
        # Pallas does not re-DMA constant-index blocks across iterations.
        return pl.BlockSpec(arr.shape, lambda i: (0, 0))

    in_arrays = [x_p]
    in_specs = [pl.BlockSpec((tb, Dp), lambda i: (i, 0))]

    flops = 0
    bytes_accessed = x_p.size * x_p.dtype.itemsize + Bp * Cp * out_itemsize

    in_dim_p = Dp
    for blk, Hp in zip(params["hidden"], Hps):
        # Fold eval-mode BatchNorm into a single scale/shift pair (computed once, outside).
        scale = blk["gamma"] * jax.lax.rsqrt(blk["rv"] + BN_EPS)
        shift = blk["beta"] - blk["rm"] * scale
        block_arrays = (
            _pad2(blk["w"], in_dim_p, Hp).astype(jnp.bfloat16),   # (in, Hp) bf16
            _pad2(blk["b"], 1, Hp),                               # (1, Hp)  f32
            _pad2(scale, 1, Hp),                                  # (1, Hp)  f32
            _pad2(shift, 1, Hp),                                  # (1, Hp)  f32
        )
        for arr in block_arrays:
            in_arrays.append(arr)
            in_specs.append(rep_spec(arr))
            bytes_accessed += arr.size * arr.dtype.itemsize
        flops += 2 * Bp * in_dim_p * Hp
        in_dim_p = Hp

    w_out_p = _pad2(params["w_out"], in_dim_p, Cp).astype(jnp.bfloat16)
    b_out_p = _pad2(params["b_out"], 1, Cp)
    for arr in (w_out_p, b_out_p):
        in_arrays.append(arr)
        in_specs.append(rep_spec(arr))
        bytes_accessed += arr.size * arr.dtype.itemsize
    flops += 2 * Bp * in_dim_p * Cp

    kernel = _make_mlp_kernel(n_hidden)
    out_p = pl.pallas_call(
        kernel,
        out_shape=jax.ShapeDtypeStruct((Bp, Cp), out_dtype),
        grid_spec=pltpu.PrefetchScalarGridSpec(
            num_scalar_prefetch=0,
            grid=(grid,),
            in_specs=in_specs,
            out_specs=pl.BlockSpec((tb, Cp), lambda i: (i, 0)),
        ),
        compiler_params=pltpu.CompilerParams(
            dimension_semantics=("parallel",),
            vmem_limit_bytes=int(vmem_limit),
        ),
        cost_estimate=pl.CostEstimate(
            flops=int(flops), transcendentals=0, bytes_accessed=int(bytes_accessed)
        ),
    )(*in_arrays)
    # Strip batch / class padding.
    return out_p[:B, :C]


# ------------------------------ params & reference ---------------------------

def init_params(key, input_size, hidden_size, num_classes, hidden_count):
    """Deterministic parameter init mirroring the PyTorch module's __init__ shapes."""
    params = {"hidden": []}
    in_dim = input_size
    for _ in range(hidden_count - 1):
        out_dim = hidden_size // 2
        key, kb = jax.random.split(key)
        bound = float(in_dim) ** -0.5
        blk = {
            # initializer = torch.nn.init.ones_ is applied to hidden Linear weights
            "w": jnp.ones((in_dim, out_dim), jnp.float32),
            # Linear bias keeps PyTorch default U(-1/sqrt(in), 1/sqrt(in))
            "b": jax.random.uniform(kb, (1, out_dim), jnp.float32, -bound, bound),
            # BatchNorm1d defaults: gamma=1, beta=0, running_mean=0, running_var=1
            "gamma": jnp.ones((1, out_dim), jnp.float32),
            "beta": jnp.zeros((1, out_dim), jnp.float32),
            "rm": jnp.zeros((1, out_dim), jnp.float32),
            "rv": jnp.ones((1, out_dim), jnp.float32),
        }
        params["hidden"].append(blk)
        in_dim = out_dim
    # Output Linear: NOT touched by `initializer` in the module -> default-style init
    key, kw, kb = jax.random.split(key, 3)
    bound = float(in_dim) ** -0.5
    params["w_out"] = jax.random.uniform(kw, (in_dim, num_classes), jnp.float32, -bound, bound)
    params["b_out"] = jax.random.uniform(kb, (1, num_classes), jnp.float32, -bound, bound)
    return params


def mlp_reference(x, params, *, use_bf16=False):
    """Pure-JAX reference of the same eval-mode forward semantics."""
    cast = (lambda a: a.astype(jnp.bfloat16)) if use_bf16 else (lambda a: a.astype(jnp.float32))
    h = cast(x)
    for blk in params["hidden"]:
        scale = blk["gamma"] * jax.lax.rsqrt(blk["rv"] + BN_EPS)
        shift = blk["beta"] - blk["rm"] * scale
        z = jnp.dot(h, cast(blk["w"]), preferred_element_type=jnp.float32) + blk["b"]
        z = jnp.maximum(z, 0.0)                  # ReLU(Linear); eval-mode Dropout is identity
        z = jnp.maximum(z * scale + shift, 0.0)  # ReLU(BatchNorm)
        h = cast(z)
    return jnp.dot(h, cast(params["w_out"]), preferred_element_type=jnp.float32) + params["b_out"]


if __name__ == "__main__":
    batch = 256           # wrapper picks the batch tile: 1 step (v5e/v6e) or 2 steps (v7x)
    input_size = 32
    hidden_size = 32      # hidden blocks use hidden_size // 2 = 16 features
    num_classes = 10
    hidden_count = 2      # one hidden block + output Linear

    key = jax.random.PRNGKey(0)
    key, kx = jax.random.split(key)
    x = jax.random.normal(kx, (batch, input_size), jnp.float32)

    params = init_params(key, input_size, hidden_size, num_classes, hidden_count)

    out = jax.block_until_ready(mlp_forward(x, params))
    assert out.shape == (batch, num_classes)

    # Tight check vs. a reference that mirrors the kernel's bf16-in / f32-accumulate math.
    ref_bf16 = mlp_reference(x, params, use_bf16=True)
    assert jnp.allclose(out, ref_bf16, atol=5e-3, rtol=5e-3), "mismatch vs bf16-matched reference"

    # Loose sanity check vs. the full-f32 reference (bf16 rounding is the only difference).
    ref_f32 = mlp_reference(x, params, use_bf16=False)
    assert jnp.allclose(out, ref_f32, atol=1.5e-1, rtol=5e-2), "mismatch vs f32 reference"

    print("KERNEL_OK")
</pallas_src>

<mosaic_0001>
module attributes {stable_mosaic.version = 11 : i64} {
  func.func @kernel(%arg0: i32, %arg1: memref<256x128xbf16, #tpu.memory_space<vmem>>, %arg2: memref<128x128xbf16, #tpu.memory_space<vmem>>, %arg3: memref<1x128xf32, #tpu.memory_space<vmem>>, %arg4: memref<1x128xf32, #tpu.memory_space<vmem>>, %arg5: memref<1x128xf32, #tpu.memory_space<vmem>>, %arg6: memref<128x128xbf16, #tpu.memory_space<vmem>>, %arg7: memref<1x128xf32, #tpu.memory_space<vmem>>, %arg8: memref<256x128xf32, #tpu.memory_space<vmem>>) attributes {dimension_semantics = [#tpu.dimension_semantics<parallel>], iteration_bounds = array<i64: 1>, scalar_prefetch = 0 : i64, scratch_operands = 0 : i64, tpu.core_type = #tpu.core_type<tc>, window_params = [{transform_indices = @transform_0, window_bounds = array<i64: 256, 128>}, {pipeline_mode = #tpu.pipeline_mode<synchronous>, transform_indices = @transform_1, window_bounds = array<i64: 128, 128>}, {pipeline_mode = #tpu.pipeline_mode<synchronous>, transform_indices = @transform_2, window_bounds = array<i64: 1, 128>}, {pipeline_mode = #tpu.pipeline_mode<synchronous>, transform_indices = @transform_3, window_bounds = array<i64: 1, 128>}, {pipeline_mode = #tpu.pipeline_mode<synchronous>, transform_indices = @transform_4, window_bounds = array<i64: 1, 128>}, {pipeline_mode = #tpu.pipeline_mode<synchronous>, transform_indices = @transform_5, window_bounds = array<i64: 128, 128>}, {pipeline_mode = #tpu.pipeline_mode<synchronous>, transform_indices = @transform_6, window_bounds = array<i64: 1, 128>}, {transform_indices = @transform_7, window_bounds = array<i64: 256, 128>}]} {
    %c0 = arith.constant 0 : index
    %c0_0 = arith.constant 0 : index
    %0 = vector.load %arg1[%c0, %c0_0] : memref<256x128xbf16, #tpu.memory_space<vmem>>, vector<256x128xbf16>
    %c0_1 = arith.constant 0 : index
    %c0_2 = arith.constant 0 : index
    %1 = vector.load %arg2[%c0_1, %c0_2] : memref<128x128xbf16, #tpu.memory_space<vmem>>, vector<128x128xbf16>
    %cst = arith.constant dense<0.000000e+00> : vector<256x128xf32>
    %2 = tpu.matmul %0, %1, %cst {dimension_numbers = #tpu.dot_dimension_numbers<[1], [0], [0], [1], [0, 0, 1, 1], [], []>} : vector<256x128xbf16>, vector<128x128xbf16>, vector<256x128xf32> -> vector<256x128xf32>
    %c0_3 = arith.constant 0 : index
    %c0_4 = arith.constant 0 : index
    %3 = vector.load %arg3[%c0_3, %c0_4] : memref<1x128xf32, #tpu.memory_space<vmem>>, vector<1x128xf32>
    %4 = vector.broadcast %3 : vector<1x128xf32> to vector<256x128xf32>
    %5 = arith.addf %2, %4 : vector<256x128xf32>
    %cst_5 = arith.constant 0.000000e+00 : f32
    %6 = vector.broadcast %cst_5 : f32 to vector<256x128xf32>
    %7 = arith.maximumf %5, %6 : vector<256x128xf32>
    %c0_6 = arith.constant 0 : index
    %c0_7 = arith.constant 0 : index
    %8 = vector.load %arg4[%c0_6, %c0_7] : memref<1x128xf32, #tpu.memory_space<vmem>>, vector<1x128xf32>
    %9 = vector.broadcast %8 : vector<1x128xf32> to vector<256x128xf32>
    %10 = arith.mulf %7, %9 : vector<256x128xf32>
    %c0_8 = arith.constant 0 : index
    %c0_9 = arith.constant 0 : index
    %11 = vector.load %arg5[%c0_8, %c0_9] : memref<1x128xf32, #tpu.memory_space<vmem>>, vector<1x128xf32>
    %12 = vector.broadcast %11 : vector<1x128xf32> to vector<256x128xf32>
    %13 = arith.addf %10, %12 : vector<256x128xf32>
    %cst_10 = arith.constant 0.000000e+00 : f32
    %14 = vector.broadcast %cst_10 : f32 to vector<256x128xf32>
    %15 = arith.maximumf %13, %14 : vector<256x128xf32>
    %16 = arith.truncf %15 : vector<256x128xf32> to vector<256x128xbf16>
    %c0_11 = arith.constant 0 : index
    %c0_12 = arith.constant 0 : index
    %17 = vector.load %arg6[%c0_11, %c0_12] : memref<128x128xbf16, #tpu.memory_space<vmem>>, vector<128x128xbf16>
    %cst_13 = arith.constant dense<0.000000e+00> : vector<256x128xf32>
    %18 = tpu.matmul %16, %17, %cst_13 {dimension_numbers = #tpu.dot_dimension_numbers<[1], [0], [0], [1], [0, 0, 1, 1], [], []>} : vector<256x128xbf16>, vector<128x128xbf16>, vector<256x128xf32> -> vector<256x128xf32>
    %c0_14 = arith.constant 0 : index
    %c0_15 = arith.constant 0 : index
    %19 = vector.load %arg7[%c0_14, %c0_15] : memref<1x128xf32, #tpu.memory_space<vmem>>, vector<1x128xf32>
    %20 = vector.broadcast %19 : vector<1x128xf32> to vector<256x128xf32>
    %21 = arith.addf %18, %20 : vector<256x128xf32>
    %c0_16 = arith.constant 0 : index
    %c0_17 = arith.constant 0 : index
    %22 = vector.load %arg8[%c0_16, %c0_17] : memref<256x128xf32, #tpu.memory_space<vmem>>, vector<256x128xf32>
    tpu.vector_store %arg8[%c0_16, %c0_17], %21 {strides = array<i32>} : memref<256x128xf32, #tpu.memory_space<vmem>>, vector<256x128xf32>,
    return
  }
  func.func @transform_0(%arg0: i32) -> (i32, i32) {
    %c0_i32 = arith.constant 0 : i32
    %c0_i32_0 = arith.constant 0 : i32
    return %arg0, %c0_i32 : i32, i32
  }
  func.func @transform_1(%arg0: i32) -> (i32, i32) {
    %c0_i32 = arith.constant 0 : i32
    %c0_i32_0 = arith.constant 0 : i32
    %c0_i32_1 = arith.constant 0 : i32
    return %c0_i32, %c0_i32_0 : i32, i32
  }
  func.func @transform_2(%arg0: i32) -> (i32, i32) {
    %c0_i32 = arith.constant 0 : i32
    %c0_i32_0 = arith.constant 0 : i32
    %c0_i32_1 = arith.constant 0 : i32
    return %c0_i32, %c0_i32_0 : i32, i32
  }
  func.func @transform_3(%arg0: i32) -> (i32, i32) {
    %c0_i32 = arith.constant 0 : i32
    %c0_i32_0 = arith.constant 0 : i32
    %c0_i32_1 = arith.constant 0 : i32
    return %c0_i32, %c0_i32_0 : i32, i32
  }
  func.func @transform_4(%arg0: i32) -> (i32, i32) {
    %c0_i32 = arith.constant 0 : i32
    %c0_i32_0 = arith.constant 0 : i32
    %c0_i32_1 = arith.constant 0 : i32
    return %c0_i32, %c0_i32_0 : i32, i32
  }
  func.func @transform_5(%arg0: i32) -> (i32, i32) {
    %c0_i32 = arith.constant 0 : i32
    %c0_i32_0 = arith.constant 0 : i32
    %c0_i32_1 = arith.constant 0 : i32
    return %c0_i32, %c0_i32_0 : i32, i32
  }
  func.func @transform_6(%arg0: i32) -> (i32, i32) {
    %c0_i32 = arith.constant 0 : i32
    %c0_i32_0 = arith.constant 0 : i32
    %c0_i32_1 = arith.constant 0 : i32
    return %c0_i32, %c0_i32_0 : i32, i32
  }
  func.func @transform_7(%arg0: i32) -> (i32, i32) {
    %c0_i32 = arith.constant 0 : i32
    %c0_i32_0 = arith.constant 0 : i32
    return %arg0, %c0_i32 : i32, i32
  }
}

</mosaic_0001>

<llo_original>
// kernel: tpu_custom_call.1
$region0: #{tpu_custom_call.1}
  #allocation0 [shape = 'u32[]', space=smem, size = 0x4, offset = 0x4, fixed_abs, tag = 'smem constant byte address 0x4 - core index']
  #allocation1 [shape = 'u32[144,128]{1,0:T(1,128)}', space=vmem, size = 0x12000, scoped, tag = 'internal scratch']
  %s0 = inlined_call_operand.hbm [shape: bf16[256,128], index: 0, kind: input, shape index: {}]
  %s1 = inlined_call_operand.hbm [shape: bf16[128,128], index: 1, kind: input, shape index: {}]
  %s2 = inlined_call_operand.vmem [shape: f32[1,128], index: 2, kind: input, shape index: {}]
  %s3 = inlined_call_operand.vmem [shape: f32[1,128], index: 3, kind: input, shape index: {}]
  %s4 = inlined_call_operand.vmem [shape: f32[1,128], index: 4, kind: input, shape index: {}]
  %s5 = inlined_call_operand.hbm [shape: bf16[128,128], index: 5, kind: input, shape index: {}]
  %s6 = inlined_call_operand.vmem [shape: f32[1,128], index: 6, kind: input, shape index: {}]
  %s7 = inlined_call_operand.hbm [shape: f32[256,128], index: 7, kind: output, shape index: {}]
  %s8 = sld [smem:[#allocation0]]
  $region50: #{tpu_custom_call.1} parent=0
    _
  %s10 = ssub.s32 1, %s8
  %s11 = scalar_select 0, %s10, %s8
  $region1: #{tpu_custom_call.1} parent=0
    #allocation2 [shape = 'u8[65536]{0}', space=vmem, size = 0x10000, scoped, tag = 'input window, operand 0, single buffered']
    #allocation3 [shape = 's32[1]{0}', space=sflag, size = 0x4, scoped, tag = 'scoped memory for tpu_custom_call.1']
    #allocation4 [shape = 's32[1]{0}', space=sflag, size = 0x4, scoped, tag = 'scoped memory for tpu_custom_call.1']
    #allocation5 [shape = 'u8[32768]{0}', space=vmem, size = 0x8000, scoped, tag = 'input window, operand 1, single buffered']
    #allocation6 [shape = 's32[1]{0}', space=sflag, size = 0x4, scoped, tag = 'scoped memory for tpu_custom_call.1']
    #allocation7 [shape = 'u8[32768]{0}', space=vmem, size = 0x8000, scoped, tag = 'input window, operand 5, single buffered']
    #allocation8 [shape = 'u8[131072]{0}', space=vmem, size = 0x20000, scoped, tag = 'output window, operand 0, single buffered']
    %12 = vsyncpa [#allocation3], 0
    %13 = vsyncpa [#allocation6], 0
    %14 = vsyncpa [#allocation4], 0
    // Predicated region
    $region2: #{tpu_custom_call.1} parent=1 // pred_check
      _
    $region3: #{tpu_custom_call.1} parent=1 // pred_check_branch
      %16 = sbr.rel (0) target = $region5
    $region4: #{tpu_custom_call.1} parent=1 // pred_region
      %s18 = ssub.s32 2048, 2048
      %19 = vsyncadd [#allocation3], %s18
      %s20 = sshll.u32 [#allocation2], 4
      %s21 = int_to_ptr.vmem [resolvable:$true] %s20
      %26 = dma.hbm_to_vmem [thread:$0]  %s0, 2048, %s21, [#allocation3], 64, 64, 4
    $region5: #{tpu_custom_call.1} parent=1 // pred_fallthru
      _
    // Predicated region
    $region6: #{tpu_custom_call.1} parent=1 // pred_check
      _
    $region7: #{tpu_custom_call.1} parent=1 // pred_check_branch
      %28 = sbr.rel (0) target = $region9
    $region8: #{tpu_custom_call.1} parent=1 // pred_region
      %s30 = ssub.s32 1024, 1024
      %31 = vsyncadd [#allocation6], %s30
      %s32 = sshll.u32 [#allocation5], 4
      %s33 = int_to_ptr.vmem [resolvable:$true] %s32
      %38 = dma.hbm_to_vmem [thread:$0]  %s1, 1024, %s33, [#allocation6], 64, 64, 4
    $region9: #{tpu_custom_call.1} parent=1 // pred_fallthru
      _
    // Predicated region
    $region10: #{tpu_custom_call.1} parent=1 // pred_check
      _
    $region11: #{tpu_custom_call.1} parent=1 // pred_check_branch
      %40 = sbr.rel (0) target = $region13
    $region12: #{tpu_custom_call.1} parent=1 // pred_region
      _
    $region13: #{tpu_custom_call.1} parent=1 // pred_fallthru
      _
    // Predicated region
    $region14: #{tpu_custom_call.1} parent=1 // pred_check
      _
    $region15: #{tpu_custom_call.1} parent=1 // pred_check_branch
      %42 = sbr.rel (0) target = $region17
    $region16: #{tpu_custom_call.1} parent=1 // pred_region
      _
    $region17: #{tpu_custom_call.1} parent=1 // pred_fallthru
      _
    // Predicated region
    $region18: #{tpu_custom_call.1} parent=1 // pred_check
      _
    $region19: #{tpu_custom_call.1} parent=1 // pred_check_branch
      %44 = sbr.rel (0) target = $region21
    $region20: #{tpu_custom_call.1} parent=1 // pred_region
      _
    $region21: #{tpu_custom_call.1} parent=1 // pred_fallthru
      _
    // Predicated region
    $region22: #{tpu_custom_call.1} parent=1 // pred_check
      _
    $region23: #{tpu_custom_call.1} parent=1 // pred_check_branch
      %46 = sbr.rel (0) target = $region25
    $region24: #{tpu_custom_call.1} parent=1 // pred_region
      %s48 = ssub.s32 1024, 1024
      %49 = vsyncadd [#allocation6], %s48
      %s50 = sshll.u32 [#allocation7], 4
      %s51 = int_to_ptr.vmem [resolvable:$true] %s50
      %56 = dma.hbm_to_vmem [thread:$0]  %s5, 1024, %s51, [#allocation6], 64, 64, 4
    $region25: #{tpu_custom_call.1} parent=1 // pred_fallthru
      _
    // Predicated region
    $region26: #{tpu_custom_call.1} parent=1 // pred_check
      _
    $region27: #{tpu_custom_call.1} parent=1 // pred_check_branch
      %58 = sbr.rel (0) target = $region29
    $region28: #{tpu_custom_call.1} parent=1 // pred_region
      _
    $region29: #{tpu_custom_call.1} parent=1 // pred_fallthru
      _
    // Predicated region
    $region30: #{tpu_custom_call.1} parent=1 // pred_check
      _
    $region31: #{tpu_custom_call.1} parent=1 // pred_check_branch
      %60 = sbr.rel (0) target = $region33
    $region32: #{tpu_custom_call.1} parent=1 // pred_region
      %61 = dma.done [#allocation3], 2048
    $region33: #{tpu_custom_call.1} parent=1 // pred_fallthru
      _
    // Predicated region
    $region34: #{tpu_custom_call.1} parent=1 // pred_check
      _
    $region35: #{tpu_custom_call.1} parent=1 // pred_check_branch
      %63 = sbr.rel (0) target = $region37
    $region36: #{tpu_custom_call.1} parent=1 // pred_region
      %64 = dma.done [#allocation6], 1024
    $region37: #{tpu_custom_call.1} parent=1 // pred_fallthru
      _
    // Predicated region
    $region38: #{tpu_custom_call.1} parent=1 // pred_check
      _
    $region39: #{tpu_custom_call.1} parent=1 // pred_check_branch
      %66 = sbr.rel (0) target = $region41
    $region40: #{tpu_custom_call.1} parent=1 // pred_region
      %67 = dma.done [#allocation6], 1024
    $region41: #{tpu_custom_call.1} parent=1 // pred_fallthru
      _
    %v69 = vld [vmem:[#allocation2] sm:$0xf]
    %v70 = vld [vmem:[#allocation2 + $0x4] sm:$0xf]
    %v71 = vld [vmem:[#allocation2 + $0x8] sm:$0xf]
    %v72 = vld [vmem:[#allocation2 + $0xc] sm:$0xf]
    %v73 = vld [vmem:[#allocation2 + $0x10] sm:$0xf]
    %v74 = vld [vmem:[#allocation2 + $0x14] sm:$0xf]
    %v75 = vld [vmem:[#allocation2 + $0x18] sm:$0xf]
    %v76 = vld [vmem:[#allocation2 + $0x1c] sm:$0xf]
    %v77 = vld [vmem:[#allocation2 + $0x20] sm:$0xf]
    %v78 = vld [vmem:[#allocation2 + $0x24] sm:$0xf]
    %v79 = vld [vmem:[#allocation2 + $0x28] sm:$0xf]
    %v80 = vld [vmem:[#allocation2 + $0x2c] sm:$0xf]
    %v81 = vld [vmem:[#allocation2 + $0x30] sm:$0xf]
    %v82 = vld [vmem:[#allocation2 + $0x34] sm:$0xf]
    %v83 = vld [vmem:[#allocation2 + $0x38] sm:$0xf]
    %v84 = vld [vmem:[#allocation2 + $0x3c] sm:$0xf]
    %v85 = vld [vmem:[#allocation2 + $0x40] sm:$0xf]
    %v86 = vld [vmem:[#allocation2 + $0x44] sm:$0xf]
    %v87 = vld [vmem:[#allocation2 + $0x48] sm:$0xf]
    %v88 = vld [vmem:[#allocation2 + $0x4c] sm:$0xf]
    %v89 = vld [vmem:[#allocation2 + $0x50] sm:$0xf]
    %v90 = vld [vmem:[#allocation2 + $0x54] sm:$0xf]
    %v91 = vld [vmem:[#allocation2 + $0x58] sm:$0xf]
    %v92 = vld [vmem:[#allocation2 + $0x5c] sm:$0xf]
    %v93 = vld [vmem:[#allocation2 + $0x60] sm:$0xf]
    %v94 = vld [vmem:[#allocation2 + $0x64] sm:$0xf]
    %v95 = vld [vmem:[#allocation2 + $0x68] sm:$0xf]
    %v96 = vld [vmem:[#allocation2 + $0x6c] sm:$0xf]
    %v97 = vld [vmem:[#allocation2 + $0x70] sm:$0xf]
    %v98 = vld [vmem:[#allocation2 + $0x74] sm:$0xf]
    %v99 = vld [vmem:[#allocation2 + $0x78] sm:$0xf]
    %v100 = vld [vmem:[#allocation2 + $0x7c] sm:$0xf]
    %v101 = vld [vmem:[#allocation5] sm:$0xf]
    %v102 = vld [vmem:[#allocation5 + $0x4] sm:$0xf]
    %v103 = vld [vmem:[#allocation5 + $0x8] sm:$0xf]
    %v104 = vld [vmem:[#allocation5 + $0xc] sm:$0xf]
    %v105 = vld [vmem:[#allocation5 + $0x10] sm:$0xf]
    %v106 = vld [vmem:[#allocation5 + $0x14] sm:$0xf]
    %v107 = vld [vmem:[#allocation5 + $0x18] sm:$0xf]
    %v108 = vld [vmem:[#allocation5 + $0x1c] sm:$0xf]
    %v109 = vld [vmem:[#allocation5 + $0x20] sm:$0xf]
    %v110 = vld [vmem:[#allocation5 + $0x24] sm:$0xf]
    %v111 = vld [vmem:[#allocation5 + $0x28] sm:$0xf]
    %v112 = vld [vmem:[#allocation5 + $0x2c] sm:$0xf]
    %v113 = vld [vmem:[#allocation5 + $0x30] sm:$0xf]
    %v114 = vld [vmem:[#allocation5 + $0x34] sm:$0xf]
    %v115 = vld [vmem:[#allocation5 + $0x38] sm:$0xf]
    %v116 = vld [vmem:[#allocation5 + $0x3c] sm:$0xf]
    %v117 = vld [vmem:[%s2] sm:$0x1]
    %v119 = vlaneseq
    %v120 = vshrl.u32 %v119, 7
    %v121 = vsub.s32 0, %v120
    %v122 = vrot.slane %v117, %v121
    %v156 = vunpack.c.l.b16 %v69
    %v157 = vunpack.c.l.b16 %v70
    %v158 = vunpack.c.l.b16 %v71
    %v159 = vunpack.c.l.b16 %v72
    %v160 = vunpack.c.l.b16 %v73
    %v161 = vunpack.c.l.b16 %v74
    %v162 = vunpack.c.l.b16 %v75
    %v163 = vunpack.c.l.b16 %v76
    %v164 = vunpack.c.l.b16 %v77
    %v165 = vunpack.c.l.b16 %v78
    %v166 = vunpack.c.l.b16 %v79
    %v167 = vunpack.c.l.b16 %v80
    %v168 = vunpack.c.l.b16 %v81
    %v169 = vunpack.c.l.b16 %v82
    %v170 = vunpack.c.l.b16 %v83
    %v171 = vunpack.c.l.b16 %v84
    %v172 = vunpack.c.l.b16 %v85
    %v173 = vunpack.c.l.b16 %v86
    %v174 = vunpack.c.l.b16 %v87
    %v175 = vunpack.c.l.b16 %v88
    %v176 = vunpack.c.l.b16 %v89
    %v177 = vunpack.c.l.b16 %v90
    %v178 = vunpack.c.l.b16 %v91
    %v179 = vunpack.c.l.b16 %v92
    %v180 = vunpack.c.l.b16 %v93
    %v181 = vunpack.c.l.b16 %v94
    %v182 = vunpack.c.l.b16 %v95
    %v183 = vunpack.c.l.b16 %v96
    %v184 = vunpack.c.l.b16 %v97
    %v185 = vunpack.c.l.b16 %v98
    %v186 = vunpack.c.l.b16 %v99
    %v187 = vunpack.c.l.b16 %v100
    %v188 = vpack.c.b16 %v157, %v156
    %v189 = vpack.c.b16 %v159, %v158
    %v190 = vpack.c.b16 %v161, %v160
    %v191 = vpack.c.b16 %v163, %v162
    %v192 = vpack.c.b16 %v165, %v164
    %v193 = vpack.c.b16 %v167, %v166
    %v194 = vpack.c.b16 %v169, %v168
    %v195 = vpack.c.b16 %v171, %v170
    %v196 = vpack.c.b16 %v173, %v172
    %v197 = vpack.c.b16 %v175, %v174
    %v198 = vpack.c.b16 %v177, %v176
    %v199 = vpack.c.b16 %v179, %v178
    %v200 = vpack.c.b16 %v181, %v180
    %v201 = vpack.c.b16 %v183, %v182
    %v202 = vpack.c.b16 %v185, %v184
    %v203 = vpack.c.b16 %v187, %v186
    %v236 = vunpack.c.l.b16 %v101
    %v237 = vunpack.c.l.b16 %v102
    %v238 = vunpack.c.l.b16 %v103
    %v239 = vunpack.c.l.b16 %v104
    %v240 = vunpack.c.l.b16 %v105
    %v241 = vunpack.c.l.b16 %v106
    %v242 = vunpack.c.l.b16 %v107
    %v243 = vunpack.c.l.b16 %v108
    %v244 = vunpack.c.l.b16 %v109
    %v245 = vunpack.c.l.b16 %v110
    %v246 = vunpack.c.l.b16 %v111
    %v247 = vunpack.c.l.b16 %v112
    %v248 = vunpack.c.l.b16 %v113
    %v249 = vunpack.c.l.b16 %v114
    %v250 = vunpack.c.l.b16 %v115
    %v251 = vunpack.c.l.b16 %v116
    %v252 = vpack.c.b16 %v237, %v236
    %v253 = vpack.c.b16 %v239, %v238
    %v254 = vpack.c.b16 %v241, %v240
    %v255 = vpack.c.b16 %v243, %v242
    %v256 = vpack.c.b16 %v245, %v244
    %v257 = vpack.c.b16 %v247, %v246
    %v258 = vpack.c.b16 %v249, %v248
    %v259 = vpack.c.b16 %v251, %v250
    %268 = vmatprep.subr.bf16.mxu0 0
    %269 = vmatpush1.bf16.msra.mxu0 %v252
    %270 = vmatprep.subr.bf16.mxu0 0
    %271 = vmatpush1.bf16.msra.mxu0 %v253
    %272 = vmatprep.subr.bf16.mxu0 0
    %273 = vmatpush1.bf16.msra.mxu0 %v254
    %274 = vmatprep.subr.bf16.mxu0 0
    %275 = vmatpush1.bf16.msra.mxu0 %v255
    %276 = vmatprep.subr.bf16.mxu0 0
    %277 = vmatpush1.bf16.msra.mxu0 %v256
    %278 = vmatprep.subr.bf16.mxu0 0
    %279 = vmatpush1.bf16.msra.mxu0 %v257
    %280 = vmatprep.subr.bf16.mxu0 0
    %281 = vmatpush1.bf16.msra.mxu0 %v258
    %282 = vmatprep.subr.bf16.mxu0 0
    %283 = vmatpush1.bf16.msra.mxu0 %v259
    %284 = vmatprep.subr.bf16.mxu0 0
    %285 = vmatpush1.bf16.msra.mxu0 0
    %286 = vmatprep.subr.bf16.mxu0 0
    %287 = vmatpush1.bf16.msra.mxu0 0
    %288 = vmatprep.subr.bf16.mxu0 0
    %289 = vmatpush1.bf16.msra.mxu0 0
    %290 = vmatprep.subr.bf16.mxu0 0
    %291 = vmatpush1.bf16.msra.mxu0 0
    %292 = vmatprep.subr.bf16.mxu0 0
    %293 = vmatpush1.bf16.msra.mxu0 0
    %294 = vmatprep.subr.bf16.mxu0 0
    %295 = vmatpush1.bf16.msra.mxu0 0
    %296 = vmatprep.subr.bf16.mxu0 0
    %297 = vmatpush1.bf16.msra.mxu0 0
    %298 = vmatprep.subr.bf16.mxu0 0
    %299 = vmatpush1.bf16.msra.mxu0 0
    %300 = vmatprep.mubr.bf16.mxu0 0
    %301 = vmatmul.mubr.bf16.gmra.mrb[0].mxu0 %v188
    %v302 = vpop.f32.mrb[0].mxu0
    %v303 = vadd.f32 %v122, %v302
    %v304 = vpop.f32.mrb[0].mxu0
    %v305 = vpop.f32.mrb[0].mxu0
    %v306 = vadd.f32 %v122, %v305
    %v307 = vpop.f32.mrb[0].mxu0
    %308 = vmatprep.mubr.bf16.mxu0 0
    %309 = vmatmul.mubr.bf16.gmra.mrb[0].mxu0 %v189
    %v310 = vpop.f32.mrb[0].mxu0
    %v311 = vadd.f32 %v122, %v310
    %v312 = vpop.f32.mrb[0].mxu0
    %v313 = vpop.f32.mrb[0].mxu0
    %v314 = vadd.f32 %v122, %v313
    %v315 = vpop.f32.mrb[0].mxu0
    %316 = vmatprep.mubr.bf16.mxu0 0
    %317 = vmatmul.mubr.bf16.gmra.mrb[0].mxu0 %v190
    %v318 = vpop.f32.mrb[0].mxu0
    %v319 = vadd.f32 %v122, %v318
    %v320 = vpop.f32.mrb[0].mxu0
    %v321 = vpop.f32.mrb[0].mxu0
    %v322 = vadd.f32 %v122, %v321
    %v323 = vpop.f32.mrb[0].mxu0
    %324 = vmatprep.mubr.bf16.mxu0 0
    %325 = vmatmul.mubr.bf16.gmra.mrb[0].mxu0 %v191
    %v326 = vpop.f32.mrb[0].mxu0
    %v327 = vadd.f32 %v122, %v326
    %v328 = vpop.f32.mrb[0].mxu0
    %v329 = vpop.f32.mrb[0].mxu0
    %v330 = vadd.f32 %v122, %v329
    %v331 = vpop.f32.mrb[0].mxu0
    %332 = vmatprep.mubr.bf16.mxu0 0
    %333 = vmatmul.mubr.bf16.gmra.mrb[0].mxu0 %v192
    %v334 = vpop.f32.mrb[0].mxu0
    %v335 = vadd.f32 %v122, %v334
    %v336 = vpop.f32.mrb[0].mxu0
    %v337 = vpop.f32.mrb[0].mxu0
    %v338 = vadd.f32 %v122, %v337
    %v339 = vpop.f32.mrb[0].mxu0
    %340 = vmatprep.mubr.bf16.mxu0 0
    %341 = vmatmul.mubr.bf16.gmra.mrb[0].mxu0 %v193
    %v342 = vpop.f32.mrb[0].mxu0
    %v343 = vadd.f32 %v122, %v342
    %v344 = vpop.f32.mrb[0].mxu0
    %v345 = vpop.f32.mrb[0].mxu0
    %v346 = vadd.f32 %v122, %v345
    %v347 = vpop.f32.mrb[0].mxu0
    %348 = vmatprep.mubr.bf16.mxu0 0
    %349 = vmatmul.mubr.bf16.gmra.mrb[0].mxu0 %v194
    %v350 = vpop.f32.mrb[0].mxu0
    %v351 = vadd.f32 %v122, %v350
    %v352 = vpop.f32.mrb[0].mxu0
    %v353 = vpop.f32.mrb[0].mxu0
    %v354 = vadd.f32 %v122, %v353
    %v355 = vpop.f32.mrb[0].mxu0
    %356 = vmatprep.mubr.bf16.mxu0 0
    %357 = vmatmul.mubr.bf16.gmra.mrb[0].mxu0 %v195
    %v358 = vpop.f32.mrb[0].mxu0
    %v359 = vadd.f32 %v122, %v358
    %v360 = vpop.f32.mrb[0].mxu0
    %v361 = vpop.f32.mrb[0].mxu0
    %v362 = vadd.f32 %v122, %v361
    %v363 = vpop.f32.mrb[0].mxu0
    %364 = vmatprep.mubr.bf16.mxu0 0
    %365 = vmatmul.mubr.bf16.gmra.mrb[0].mxu0 %v196
    %v366 = vpop.f32.mrb[0].mxu0
    %v367 = vadd.f32 %v122, %v366
    %v368 = vpop.f32.mrb[0].mxu0
    %v369 = vpop.f32.mrb[0].mxu0
    %v370 = vadd.f32 %v122, %v369
    %v371 = vpop.f32.mrb[0].mxu0
    %372 = vmatprep.mubr.bf16.mxu0 0
    %373 = vmatmul.mubr.bf16.gmra.mrb[0].mxu0 %v197
    %v374 = vpop.f32.mrb[0].mxu0
    %v375 = vadd.f32 %v122, %v374
    %v376 = vpop.f32.mrb[0].mxu0
    %v377 = vpop.f32.mrb[0].mxu0
    %v378 = vadd.f32 %v122, %v377
    %v379 = vpop.f32.mrb[0].mxu0
    %380 = vmatprep.mubr.bf16.mxu0 0
    %381 = vmatmul.mubr.bf16.gmra.mrb[0].mxu0 %v198
    %v382 = vpop.f32.mrb[0].mxu0
    %v383 = vadd.f32 %v122, %v382
    %v384 = vpop.f32.mrb[0].mxu0
    %v385 = vpop.f32.mrb[0].mxu0
    %v386 = vadd.f32 %v122, %v385
    %v387 = vpop.f32.mrb[0].mxu0
    %388 = vmatprep.mubr.bf16.mxu0 0
    %389 = vmatmul.mubr.bf16.gmra.mrb[0].mxu0 %v199
    %v390 = vpop.f32.mrb[0].mxu0
    %v391 = vadd.f32 %v122, %v390
    %v392 = vpop.f32.mrb[0].mxu0
    %v393 = vpop.f32.mrb[0].mxu0
    %v394 = vadd.f32 %v122, %v393
    %v395 = vpop.f32.mrb[0].mxu0
    %396 = vmatprep.mubr.bf16.mxu0 0
    %397 = vmatmul.mubr.bf16.gmra.mrb[0].mxu0 %v200
    %v398 = vpop.f32.mrb[0].mxu0
    %v399 = vadd.f32 %v122, %v398
    %v400 = vpop.f32.mrb[0].mxu0
    %v401 = vpop.f32.mrb[0].mxu0
    %v402 = vadd.f32 %v122, %v401
    %v403 = vpop.f32.mrb[0].mxu0
    %404 = vmatprep.mubr.bf16.mxu0 0
    %405 = vmatmul.mubr.bf16.gmra.mrb[0].mxu0 %v201
    %v406 = vpop.f32.mrb[0].mxu0
    %v407 = vadd.f32 %v122, %v406
    %v408 = vpop.f32.mrb[0].mxu0
    %v409 = vpop.f32.mrb[0].mxu0
    %v410 = vadd.f32 %v122, %v409
    %v411 = vpop.f32.mrb[0].mxu0
    %412 = vmatprep.mubr.bf16.mxu0 0
    %413 = vmatmul.mubr.bf16.gmra.mrb[0].mxu0 %v202
    %v414 = vpop.f32.mrb[0].mxu0
    %v415 = vadd.f32 %v122, %v414
    %v416 = vpop.f32.mrb[0].mxu0
    %v417 = vpop.f32.mrb[0].mxu0
    %v418 = vadd.f32 %v122, %v417
    %v419 = vpop.f32.mrb[0].mxu0
    %420 = vmatprep.mubr.bf16.mxu0 0
    %421 = vmatmul.mubr.bf16.gmra.mrb[0].mxu0 %v203
    %v422 = vpop.f32.mrb[0].mxu0
    %v423 = vadd.f32 %v122, %v422
    %v424 = vpop.f32.mrb[0].mxu0
    %v425 = vpop.f32.mrb[0].mxu0
    %v426 = vadd.f32 %v122, %v425
    %v427 = vpop.f32.mrb[0].mxu0
    %428 = vdwg.mxu0
    %v429 = vmax.f32 %v303, 0.0
    %v430 = vmax.f32 %v306, 0.0
    %v431 = vmax.f32 %v311, 0.0
    %v432 = vmax.f32 %v314, 0.0
    %v433 = vmax.f32 %v319, 0.0
    %v434 = vmax.f32 %v322, 0.0
    %v435 = vmax.f32 %v327, 0.0
    %v436 = vmax.f32 %v330, 0.0
    %v437 = vmax.f32 %v335, 0.0
    %v438 = vmax.f32 %v338, 0.0
    %v439 = vmax.f32 %v343, 0.0
    %v440 = vmax.f32 %v346, 0.0
    %v441 = vmax.f32 %v351, 0.0
    %v442 = vmax.f32 %v354, 0.0
    %v443 = vmax.f32 %v359, 0.0
    %v444 = vmax.f32 %v362, 0.0
    %v445 = vmax.f32 %v367, 0.0
    %v446 = vmax.f32 %v370, 0.0
    %v447 = vmax.f32 %v375, 0.0
    %v448 = vmax.f32 %v378, 0.0
    %v449 = vmax.f32 %v383, 0.0
    %v450 = vmax.f32 %v386, 0.0
    %v451 = vmax.f32 %v391, 0.0
    %v452 = vmax.f32 %v394, 0.0
    %v453 = vmax.f32 %v399, 0.0
    %v454 = vmax.f32 %v402, 0.0
    %v455 = vmax.f32 %v407, 0.0
    %v456 = vmax.f32 %v410, 0.0
    %v457 = vmax.f32 %v415, 0.0
    %v458 = vmax.f32 %v418, 0.0
    %v459 = vmax.f32 %v423, 0.0
    %v460 = vmax.f32 %v426, 0.0
    %v461 = vld [vmem:[%s3] sm:$0x1]
    %v463 = vlaneseq
    %v464 = vshrl.u32 %v463, 7
    %v465 = vsub.s32 0, %v464
    %v466 = vrot.slane %v461, %v465
    %v468 = vmul.f32 %v429, %v466
    %v469 = vmul.f32 %v430, %v466
    %v470 = vmul.f32 %v431, %v466
    %v471 = vmul.f32 %v432, %v466
    %v472 = vmul.f32 %v433, %v466
    %v473 = vmul.f32 %v434, %v466
    %v474 = vmul.f32 %v435, %v466
    %v475 = vmul.f32 %v436, %v466
    %v476 = vmul.f32 %v437, %v466
    %v477 = vmul.f32 %v438, %v466
    %v478 = vmul.f32 %v439, %v466
    %v479 = vmul.f32 %v440, %v466
    %v480 = vmul.f32 %v441, %v466
    %v481 = vmul.f32 %v442, %v466
    %v482 = vmul.f32 %v443, %v466
    %v483 = vmul.f32 %v444, %v466
    %v484 = vmul.f32 %v445, %v466
    %v485 = vmul.f32 %v446, %v466
    %v486 = vmul.f32 %v447, %v466
    %v487 = vmul.f32 %v448, %v466
    %v488 = vmul.f32 %v449, %v466
    %v489 = vmul.f32 %v450, %v466
    %v490 = vmul.f32 %v451, %v466
    %v491 = vmul.f32 %v452, %v466
    %v492 = vmul.f32 %v453, %v466
    %v493 = vmul.f32 %v454, %v466
    %v494 = vmul.f32 %v455, %v466
    %v495 = vmul.f32 %v456, %v466
    %v496 = vmul.f32 %v457, %v466
    %v497 = vmul.f32 %v458, %v466
    %v498 = vmul.f32 %v459, %v466
    %v499 = vmul.f32 %v460, %v466
    %v500 = vld [vmem:[%s4] sm:$0x1]
    %v502 = vlaneseq
    %v503 = vshrl.u32 %v502, 7
    %v504 = vsub.s32 0, %v503
    %v505 = vrot.slane %v500, %v504
    %v507 = vadd.f32 %v468, %v505
    %v508 = vadd.f32 %v469, %v505
    %v509 = vadd.f32 %v470, %v505
    %v510 = vadd.f32 %v471, %v505
    %v511 = vadd.f32 %v472, %v505
    %v512 = vadd.f32 %v473, %v505
    %v513 = vadd.f32 %v474, %v505
    %v514 = vadd.f32 %v475, %v505
    %v515 = vadd.f32 %v476, %v505
    %v516 = vadd.f32 %v477, %v505
    %v517 = vadd.f32 %v478, %v505
    %v518 = vadd.f32 %v479, %v505
    %v519 = vadd.f32 %v480, %v505
    %v520 = vadd.f32 %v481, %v505
    %v521 = vadd.f32 %v482, %v505
    %v522 = vadd.f32 %v483, %v505
    %v523 = vadd.f32 %v484, %v505
    %v524 = vadd.f32 %v485, %v505
    %v525 = vadd.f32 %v486, %v505
    %v526 = vadd.f32 %v487, %v505
    %v527 = vadd.f32 %v488, %v505
    %v528 = vadd.f32 %v489, %v505
    %v529 = vadd.f32 %v490, %v505
    %v530 = vadd.f32 %v491, %v505
    %v531 = vadd.f32 %v492, %v505
    %v532 = vadd.f32 %v493, %v505
    %v533 = vadd.f32 %v494, %v505
    %v534 = vadd.f32 %v495, %v505
    %v535 = vadd.f32 %v496, %v505
    %v536 = vadd.f32 %v497, %v505
    %v537 = vadd.f32 %v498, %v505
    %v538 = vadd.f32 %v499, %v505
    %v539 = vmax.f32 %v507, 0.0
    %v540 = vmax.f32 %v508, 0.0
    %v541 = vmax.f32 %v509, 0.0
    %v542 = vmax.f32 %v510, 0.0
    %v543 = vmax.f32 %v511, 0.0
    %v544 = vmax.f32 %v512, 0.0
    %v545 = vmax.f32 %v513, 0.0
    %v546 = vmax.f32 %v514, 0.0
    %v547 = vmax.f32 %v515, 0.0
    %v548 = vmax.f32 %v516, 0.0
    %v549 = vmax.f32 %v517, 0.0
    %v550 = vmax.f32 %v518, 0.0
    %v551 = vmax.f32 %v519, 0.0
    %v552 = vmax.f32 %v520, 0.0
    %v553 = vmax.f32 %v521, 0.0
    %v554 = vmax.f32 %v522, 0.0
    %v555 = vmax.f32 %v523, 0.0
    %v556 = vmax.f32 %v524, 0.0
    %v557 = vmax.f32 %v525, 0.0
    %v558 = vmax.f32 %v526, 0.0
    %v559 = vmax.f32 %v527, 0.0
    %v560 = vmax.f32 %v528, 0.0
    %v561 = vmax.f32 %v529, 0.0
    %v562 = vmax.f32 %v530, 0.0
    %v563 = vmax.f32 %v531, 0.0
    %v564 = vmax.f32 %v532, 0.0
    %v565 = vmax.f32 %v533, 0.0
    %v566 = vmax.f32 %v534, 0.0
    %v567 = vmax.f32 %v535, 0.0
    %v568 = vmax.f32 %v536, 0.0
    %v569 = vmax.f32 %v537, 0.0
    %v570 = vmax.f32 %v538, 0.0
    %v571 = vpack.c.bf16 %v540, %v539
    %v572 = vpack.c.bf16 %v542, %v541
    %v573 = vpack.c.bf16 %v544, %v543
    %v574 = vpack.c.bf16 %v546, %v545
    %v575 = vpack.c.bf16 %v548, %v547
    %v576 = vpack.c.bf16 %v550, %v549
    %v577 = vpack.c.bf16 %v552, %v551
    %v578 = vpack.c.bf16 %v554, %v553
    %v579 = vpack.c.bf16 %v556, %v555
    %v580 = vpack.c.bf16 %v558, %v557
    %v581 = vpack.c.bf16 %v560, %v559
    %v582 = vpack.c.bf16 %v562, %v561
    %v583 = vpack.c.bf16 %v564, %v563
    %v584 = vpack.c.bf16 %v566, %v565
    %v585 = vpack.c.bf16 %v568, %v567
    %v586 = vpack.c.bf16 %v570, %v569
    %v587 = vld [vmem:[#allocation7] sm:$0xf]
    %v588 = vld [vmem:[#allocation7 + $0x4] sm:$0xf]
    %v589 = vld [vmem:[#allocation7 + $0x8] sm:$0xf]
    %v590 = vld [vmem:[#allocation7 + $0xc] sm:$0xf]
    %v591 = vld [vmem:[#allocation7 + $0x10] sm:$0xf]
    %v592 = vld [vmem:[#allocation7 + $0x14] sm:$0xf]
    %v593 = vld [vmem:[#allocation7 + $0x18] sm:$0xf]
    %v594 = vld [vmem:[#allocation7 + $0x1c] sm:$0xf]
    %v595 = vld [vmem:[#allocation7 + $0x20] sm:$0xf]
    %v596 = vld [vmem:[#allocation7 + $0x24] sm:$0xf]
    %v597 = vld [vmem:[#allocation7 + $0x28] sm:$0xf]
    %v598 = vld [vmem:[#allocation7 + $0x2c] sm:$0xf]
    %v599 = vld [vmem:[#allocation7 + $0x30] sm:$0xf]
    %v600 = vld [vmem:[#allocation7 + $0x34] sm:$0xf]
    %v601 = vld [vmem:[#allocation7 + $0x38] sm:$0xf]
    %v602 = vld [vmem:[#allocation7 + $0x3c] sm:$0xf]
    %v603 = vld [vmem:[%s6] sm:$0x1]
    %v605 = vlaneseq
    %v606 = vshrl.u32 %v605, 7
    %v607 = vsub.s32 0, %v606
    %v608 = vrot.slane %v603, %v607
    %v626 = vunpack.c.l.b16 %v587
    %v627 = vunpack.c.l.b16 %v588
    %v628 = vunpack.c.l.b16 %v589
    %v629 = vunpack.c.l.b16 %v590
    %v630 = vunpack.c.l.b16 %v591
    %v631 = vunpack.c.l.b16 %v592
    %v632 = vunpack.c.l.b16 %v593
    %v633 = vunpack.c.l.b16 %v594
    %v634 = vunpack.c.l.b16 %v595
    %v635 = vunpack.c.l.b16 %v596
    %v636 = vunpack.c.l.b16 %v597
    %v637 = vunpack.c.l.b16 %v598
    %v638 = vunpack.c.l.b16 %v599
    %v639 = vunpack.c.l.b16 %v600
    %v640 = vunpack.c.l.b16 %v601
    %v641 = vunpack.c.l.b16 %v602
    %v642 = vpack.c.b16 %v627, %v626
    %v643 = vpack.c.b16 %v629, %v628
    %v644 = vpack.c.b16 %v631, %v630
    %v645 = vpack.c.b16 %v633, %v632
    %v646 = vpack.c.b16 %v635, %v634
    %v647 = vpack.c.b16 %v637, %v636
    %v648 = vpack.c.b16 %v639, %v638
    %v649 = vpack.c.b16 %v641, %v640
    %658 = vmatprep.subr.bf16.mxu0 0
    %659 = vmatpush1.bf16.msra.mxu0 %v642
    %660 = vmatprep.subr.bf16.mxu0 0
    %661 = vmatpush1.bf16.msra.mxu0 %v643
    %662 = vmatprep.subr.bf16.mxu0 0
    %663 = vmatpush1.bf16.msra.mxu0 %v644
    %664 = vmatprep.subr.bf16.mxu0 0
    %665 = vmatpush1.bf16.msra.mxu0 %v645
    %666 = vmatprep.subr.bf16.mxu0 0
    %667 = vmatpush1.bf16.msra.mxu0 %v646
    %668 = vmatprep.subr.bf16.mxu0 0
    %669 = vmatpush1.bf16.msra.mxu0 %v647
    %670 = vmatprep.subr.bf16.mxu0 0
    %671 = vmatpush1.bf16.msra.mxu0 %v648
    %672 = vmatprep.subr.bf16.mxu0 0
    %673 = vmatpush1.bf16.msra.mxu0 %v649
    %674 = vmatprep.subr.bf16.mxu0 0
    %675 = vmatpush1.bf16.msra.mxu0 0
    %676 = vmatprep.subr.bf16.mxu0 0
    %677 = vmatpush1.bf16.msra.mxu0 0
    %678 = vmatprep.subr.bf16.mxu0 0
    %679 = vmatpush1.bf16.msra.mxu0 0
    %680 = vmatprep.subr.bf16.mxu0 0
    %681 = vmatpush1.bf16.msra.mxu0 0
    %682 = vmatprep.subr.bf16.mxu0 0
    %683 = vmatpush1.bf16.msra.mxu0 0
    %684 = vmatprep.subr.bf16.mxu0 0
    %685 = vmatpush1.bf16.msra.mxu0 0
    %686 = vmatprep.subr.bf16.mxu0 0
    %687 = vmatpush1.bf16.msra.mxu0 0
    %688 = vmatprep.subr.bf16.mxu0 0
    %689 = vmatpush1.bf16.msra.mxu0 0
    %690 = vmatprep.mubr.bf16.mxu0 0
    %691 = vmatmul.mubr.bf16.gmra.mrb[0].mxu0 %v571
    %v692 = vpop.f32.mrb[0].mxu0
    %v693 = vadd.f32 %v608, %v692
    %v694 = vpop.f32.mrb[0].mxu0
    %v695 = vpop.f32.mrb[0].mxu0
    %v696 = vadd.f32 %v608, %v695
    %v697 = vpop.f32.mrb[0].mxu0
    %698 = vmatprep.mubr.bf16.mxu0 0
    %699 = vmatmul.mubr.bf16.gmra.mrb[0].mxu0 %v572
    %v700 = vpop.f32.mrb[0].mxu0
    %v701 = vadd.f32 %v608, %v700
    %v702 = vpop.f32.mrb[0].mxu0
    %v703 = vpop.f32.mrb[0].mxu0
    %v704 = vadd.f32 %v608, %v703
    %v705 = vpop.f32.mrb[0].mxu0
    %706 = vmatprep.mubr.bf16.mxu0 0
    %707 = vmatmul.mubr.bf16.gmra.mrb[0].mxu0 %v573
    %v708 = vpop.f32.mrb[0].mxu0
    %v709 = vadd.f32 %v608, %v708
    %v710 = vpop.f32.mrb[0].mxu0
    %v711 = vpop.f32.mrb[0].mxu0
    %v712 = vadd.f32 %v608, %v711
    %v713 = vpop.f32.mrb[0].mxu0
    %714 = vmatprep.mubr.bf16.mxu0 0
    %715 = vmatmul.mubr.bf16.gmra.mrb[0].mxu0 %v574
    %v716 = vpop.f32.mrb[0].mxu0
    %v717 = vadd.f32 %v608, %v716
    %v718 = vpop.f32.mrb[0].mxu0
    %v719 = vpop.f32.mrb[0].mxu0
    %v720 = vadd.f32 %v608, %v719
    %v721 = vpop.f32.mrb[0].mxu0
    %722 = vmatprep.mubr.bf16.mxu0 0
    %723 = vmatmul.mubr.bf16.gmra.mrb[0].mxu0 %v575
    %v724 = vpop.f32.mrb[0].mxu0
    %v725 = vadd.f32 %v608, %v724
    %v726 = vpop.f32.mrb[0].mxu0
    %v727 = vpop.f32.mrb[0].mxu0
    %v728 = vadd.f32 %v608, %v727
    %v729 = vpop.f32.mrb[0].mxu0
    %730 = vmatprep.mubr.bf16.mxu0 0
    %731 = vmatmul.mubr.bf16.gmra.mrb[0].mxu0 %v576
    %v732 = vpop.f32.mrb[0].mxu0
    %v733 = vadd.f32 %v608, %v732
    %v734 = vpop.f32.mrb[0].mxu0
    %v735 = vpop.f32.mrb[0].mxu0
    %v736 = vadd.f32 %v608, %v735
    %v737 = vpop.f32.mrb[0].mxu0
    %738 = vmatprep.mubr.bf16.mxu0 0
    %739 = vmatmul.mubr.bf16.gmra.mrb[0].mxu0 %v577
    %v740 = vpop.f32.mrb[0].mxu0
    %v741 = vadd.f32 %v608, %v740
    %v742 = vpop.f32.mrb[0].mxu0
    %v743 = vpop.f32.mrb[0].mxu0
    %v744 = vadd.f32 %v608, %v743
    %v745 = vpop.f32.mrb[0].mxu0
    %746 = vmatprep.mubr.bf16.mxu0 0
    %747 = vmatmul.mubr.bf16.gmra.mrb[0].mxu0 %v578
    %v748 = vpop.f32.mrb[0].mxu0
    %v749 = vadd.f32 %v608, %v748
    %v750 = vpop.f32.mrb[0].mxu0
    %v751 = vpop.f32.mrb[0].mxu0
    %v752 = vadd.f32 %v608, %v751
    %v753 = vpop.f32.mrb[0].mxu0
    %754 = vmatprep.mubr.bf16.mxu0 0
    %755 = vmatmul.mubr.bf16.gmra.mrb[0].mxu0 %v579
    %v756 = vpop.f32.mrb[0].mxu0
    %v757 = vadd.f32 %v608, %v756
    %v758 = vpop.f32.mrb[0].mxu0
    %v759 = vpop.f32.mrb[0].mxu0
    %v760 = vadd.f32 %v608, %v759
    %v761 = vpop.f32.mrb[0].mxu0
    %762 = vmatprep.mubr.bf16.mxu0 0
    %763 = vmatmul.mubr.bf16.gmra.mrb[0].mxu0 %v580
    %v764 = vpop.f32.mrb[0].mxu0
    %v765 = vadd.f32 %v608, %v764
    %v766 = vpop.f32.mrb[0].mxu0
    %v767 = vpop.f32.mrb[0].mxu0
    %v768 = vadd.f32 %v608, %v767
    %v769 = vpop.f32.mrb[0].mxu0
    %770 = vmatprep.mubr.bf16.mxu0 0
    %771 = vmatmul.mubr.bf16.gmra.mrb[0].mxu0 %v581
    %v772 = vpop.f32.mrb[0].mxu0
    %v773 = vadd.f32 %v608, %v772
    %v774 = vpop.f32.mrb[0].mxu0
    %v775 = vpop.f32.mrb[0].mxu0
    %v776 = vadd.f32 %v608, %v775
    %v777 = vpop.f32.mrb[0].mxu0
    %778 = vmatprep.mubr.bf16.mxu0 0
    %779 = vmatmul.mubr.bf16.gmra.mrb[0].mxu0 %v582
    %v780 = vpop.f32.mrb[0].mxu0
    %v781 = vadd.f32 %v608, %v780
    %v782 = vpop.f32.mrb[0].mxu0
    %v783 = vpop.f32.mrb[0].mxu0
    %v784 = vadd.f32 %v608, %v783
    %v785 = vpop.f32.mrb[0].mxu0
    %786 = vmatprep.mubr.bf16.mxu0 0
    %787 = vmatmul.mubr.bf16.gmra.mrb[0].mxu0 %v583
    %v788 = vpop.f32.mrb[0].mxu0
    %v789 = vadd.f32 %v608, %v788
    %v790 = vpop.f32.mrb[0].mxu0
    %v791 = vpop.f32.mrb[0].mxu0
    %v792 = vadd.f32 %v608, %v791
    %v793 = vpop.f32.mrb[0].mxu0
    %794 = vmatprep.mubr.bf16.mxu0 0
    %795 = vmatmul.mubr.bf16.gmra.mrb[0].mxu0 %v584
    %v796 = vpop.f32.mrb[0].mxu0
    %v797 = vadd.f32 %v608, %v796
    %v798 = vpop.f32.mrb[0].mxu0
    %v799 = vpop.f32.mrb[0].mxu0
    %v800 = vadd.f32 %v608, %v799
    %v801 = vpop.f32.mrb[0].mxu0
    %802 = vmatprep.mubr.bf16.mxu0 0
    %803 = vmatmul.mubr.bf16.gmra.mrb[0].mxu0 %v585
    %v804 = vpop.f32.mrb[0].mxu0
    %v805 = vadd.f32 %v608, %v804
    %v806 = vpop.f32.mrb[0].mxu0
    %v807 = vpop.f32.mrb[0].mxu0
    %v808 = vadd.f32 %v608, %v807
    %v809 = vpop.f32.mrb[0].mxu0
    %810 = vmatprep.mubr.bf16.mxu0 0
    %811 = vmatmul.mubr.bf16.gmra.mrb[0].mxu0 %v586
    %v812 = vpop.f32.mrb[0].mxu0
    %v813 = vadd.f32 %v608, %v812
    %v814 = vpop.f32.mrb[0].mxu0
    %v815 = vpop.f32.mrb[0].mxu0
    %v816 = vadd.f32 %v608, %v815
    %v817 = vpop.f32.mrb[0].mxu0
    %818 = vdwg.mxu0
    %819 = vst [vmem:[#allocation8] sm:$0xff] %v693
    %820 = vst [vmem:[#allocation8 + $0x8] sm:$0xff] %v696
    %821 = vst [vmem:[#allocation8 + $0x10] sm:$0xff] %v701
    %822 = vst [vmem:[#allocation8 + $0x18] sm:$0xff] %v704
    %823 = vst [vmem:[#allocation8 + $0x20] sm:$0xff] %v709
    %824 = vst [vmem:[#allocation8 + $0x28] sm:$0xff] %v712
    %825 = vst [vmem:[#allocation8 + $0x30] sm:$0xff] %v717
    %826 = vst [vmem:[#allocation8 + $0x38] sm:$0xff] %v720
    %827 = vst [vmem:[#allocation8 + $0x40] sm:$0xff] %v725
    %828 = vst [vmem:[#allocation8 + $0x48] sm:$0xff] %v728
    %829 = vst [vmem:[#allocation8 + $0x50] sm:$0xff] %v733
    %830 = vst [vmem:[#allocation8 + $0x58] sm:$0xff] %v736
    %831 = vst [vmem:[#allocation8 + $0x60] sm:$0xff] %v741
    %832 = vst [vmem:[#allocation8 + $0x68] sm:$0xff] %v744
    %833 = vst [vmem:[#allocation8 + $0x70] sm:$0xff] %v749
    %834 = vst [vmem:[#allocation8 + $0x78] sm:$0xff] %v752
    %835 = vst [vmem:[#allocation8 + $0x80] sm:$0xff] %v757
    %836 = vst [vmem:[#allocation8 + $0x88] sm:$0xff] %v760
    %837 = vst [vmem:[#allocation8 + $0x90] sm:$0xff] %v765
    %838 = vst [vmem:[#allocation8 + $0x98] sm:$0xff] %v768
    %839 = vst [vmem:[#allocation8 + $0xa0] sm:$0xff] %v773
    %840 = vst [vmem:[#allocation8 + $0xa8] sm:$0xff] %v776
    %841 = vst [vmem:[#allocation8 + $0xb0] sm:$0xff] %v781
    %842 = vst [vmem:[#allocation8 + $0xb8] sm:$0xff] %v784
    %843 = vst [vmem:[#allocation8 + $0xc0] sm:$0xff] %v789
    %844 = vst [vmem:[#allocation8 + $0xc8] sm:$0xff] %v792
    %845 = vst [vmem:[#allocation8 + $0xd0] sm:$0xff] %v797
    %846 = vst [vmem:[#allocation8 + $0xd8] sm:$0xff] %v800
    %847 = vst [vmem:[#allocation8 + $0xe0] sm:$0xff] %v805
    %848 = vst [vmem:[#allocation8 + $0xe8] sm:$0xff] %v808
    %849 = vst [vmem:[#allocation8 + $0xf0] sm:$0xff] %v813
    %850 = vst [vmem:[#allocation8 + $0xf8] sm:$0xff] %v816
    // Predicated region
    $region42: #{tpu_custom_call.1} parent=1 // pred_check
      _
    $region43: #{tpu_custom_call.1} parent=1 // pred_check_branch
      %852 = sbr.rel (0) target = $region45
    $region44: #{tpu_custom_call.1} parent=1 // pred_region
      %s854 = ssub.s32 4096, 4096
      %855 = vsyncadd [#allocation4], %s854
      %s856 = sshll.u32 [#allocation8], 4
      %s857 = int_to_ptr.vmem [resolvable:$true] %s856
      %862 = dma.vmem_to_hbm [thread:$0]  %s857, 4096, %s7, [#allocation4], 128, 128, 8
    $region45: #{tpu_custom_call.1} parent=1 // pred_fallthru
      _
    // Predicated region
    $region46: #{tpu_custom_call.1} parent=1 // pred_check
      _
    $region47: #{tpu_custom_call.1} parent=1 // pred_check_branch
      %864 = sbr.rel (0) target = $region49
    $region48: #{tpu_custom_call.1} parent=1 // pred_region
      %865 = dma.done [#allocation4], 4096
    $region49: #{tpu_custom_call.1} parent=1 // pred_fallthru
      _
    %866 = vsyncpa [#allocation3], 1
    %867 = vsyncpa [#allocation6], 1
    %868 = vsyncpa [#allocation4], 1

</llo_original>
